<compile_context>
chip_gen: v5e
topology: v5e:2x2
jax: 0.10.0
libtpu: 0.0.40
codegen_flags: <defaults>
</compile_context>

<pallas_src>
import functools
import math

import jax
import jax.numpy as jnp
from jax.experimental import pallas as pl
from jax.experimental.pallas import tpu as pltpu

LANES = 128
MAX_TILE_ROWS = 8192   # 8192 x 128 x 4 B = 4 MiB per f32 input block


def _combined_loss_kernel(pred_ref, target_ref, out_ref, *,
                          n_valid, tile_m, tiles_per_split):
    s = pl.program_id(0)             # parallel split (dual-TensorCore axis)
    k = pl.program_id(1)             # streaming / reduction axis
    blk = s * tiles_per_split + k    # global row-block index (may be phantom)

    @pl.when(k == 0)
    def _init():
        out_ref[...] = jnp.zeros_like(out_ref)

    p = pred_ref[...].astype(jnp.float32)
    t = target_ref[...].astype(jnp.float32)

    def _row_reduce(x):
        # (tile_m, 128) -> (8, 128): whole-vreg VPU adds, no cross-lane work.
        if tile_m % 8 == 0:
            return x.reshape(tile_m // 8, 8, LANES).sum(axis=0)
        # Tiny-input fallback (tile_m == m < 8k and not a multiple of 8):
        # one sublane collapse, placed in row 0 of the (8,128) slab.
        r = jnp.sum(x, axis=0, keepdims=True)                       # (1, 128)
        sub = jax.lax.broadcasted_iota(jnp.int32, (8, LANES), 0)
        return jnp.where(sub == 0, r, 0.0)

    def _accumulate(p, t, valid=None):
        if valid is not None:
            p = jnp.where(valid, p, 0.0)
            t = jnp.where(valid, t, 0.0)
        pt = p * t
        # Numerically-stable BCE-with-logits WITHOUT the -x*z term:
        #   relu(x) + log1p(exp(-|x|))
        # The full BCE sum is reconstructed in the wrapper as (this sum) - sum(pt).
        rs = jnp.maximum(p, 0.0) + jnp.log1p(jnp.exp(-jnp.abs(p)))
        if valid is not None:
            rs = jnp.where(valid, rs, 0.0)
        # Four (8,128) slabs of the resident output block: unmasked vreg adds.
        out_ref[0:8, :] += _row_reduce(pt)
        out_ref[8:16, :] += _row_reduce(p)
        out_ref[16:24, :] += _row_reduce(t)
        out_ref[24:32, :] += _row_reduce(rs)

    # Only the last (or phantom) global block can overhang the valid elements.
    is_tail = (blk + 1) * (tile_m * LANES) > n_valid

    @pl.when(jnp.logical_not(is_tail))
    def _full_block():
        _accumulate(p, t)

    @pl.when(is_tail)
    def _tail_block():
        row = blk * tile_m + jax.lax.broadcasted_iota(
            jnp.int32, (tile_m, LANES), 0)
        lane = jax.lax.broadcasted_iota(jnp.int32, (tile_m, LANES), 1)
        valid = row * LANES + lane < n_valid
        _accumulate(p, t, valid=valid)


def combined_loss(pred, target, alpha=0.5, *, max_tile_rows=MAX_TILE_ROWS):
    """JAX/Pallas equivalent of CombinedLoss.forward(pred, target) -> scalar f32.

    Caller contract: pass pred/target in their native dtype (bf16 upstream
    activations should stay bf16 — the kernel upcasts per tile); do NOT upcast
    to f32 in the wrapper, it doubles HBM traffic on a memory-bound kernel.
    """
    assert pred.shape == target.shape
    assert max_tile_rows % 8 == 0
    total = math.prod(pred.shape)
    assert total > 0

    m = (total + LANES - 1) // LANES          # rows of the (m, 128) slab
    pad = m * LANES - total

    pflat = jnp.reshape(pred, (-1,))
    tflat = jnp.reshape(target, (-1,))
    if pad:
        # Only non-multiple-of-128 totals pay this tiny pad; padded elements
        # are masked in-kernel so they never contribute to either loss term.
        pflat = jnp.pad(pflat, (0, pad))
        tflat = jnp.pad(tflat, (0, pad))
    p2 = jnp.reshape(pflat, (m, LANES))
    t2 = jnp.reshape(tflat, (m, LANES))

    # Streaming tile: large (8,128)-aligned tile, or the full array for small
    # inputs (full-dim exemption of the (8,128) rule).
    tile_m = m if m <= max_tile_rows else max_tile_rows
    nb = (m + tile_m - 1) // tile_m           # number of row blocks

    # Unconditional 2-way split over the leading "parallel" axis (keeps both
    # v7x TensorCores busy).  Odd block counts get one phantom block: its DMA
    # block index is clamped in-bounds and all its rows are masked.
    nsplit = 2 if nb >= 2 else 1
    tps = (nb + nsplit - 1) // nsplit         # tiles per split

    if nsplit * tps == nb:
        in_map = lambda s, k: (s * tps + k, 0)
    else:
        last = nb - 1
        in_map = lambda s, k: (jnp.minimum(s * tps + k, last), 0)

    partials = pl.pallas_call(
        functools.partial(_combined_loss_kernel,
                          n_valid=total, tile_m=tile_m, tiles_per_split=tps),
        out_shape=jax.ShapeDtypeStruct((nsplit, 32, LANES), jnp.float32),
        grid_spec=pltpu.PrefetchScalarGridSpec(
            num_scalar_prefetch=0,
            grid=(nsplit, tps),
            in_specs=[
                pl.BlockSpec((tile_m, LANES), in_map),
                pl.BlockSpec((tile_m, LANES), in_map),
            ],
            out_specs=pl.BlockSpec((None, 32, LANES), lambda s, k: (s, 0, 0)),
        ),
        compiler_params=pltpu.CompilerParams(
            dimension_semantics=("parallel", "arbitrary"),
            # 16 MiB of double-buffered input blocks + headroom; above v5e's
            # 16 MiB default scoped VMEM, well below v7x's 64 MiB physical.
            vmem_limit_bytes=40 * 1024 * 1024),
    )(p2, t2)

    # Tiny finalize on the (nsplit, 32, 128) per-lane partial sums.
    s_pt = jnp.sum(partials[:, 0:8, :])
    s_p = jnp.sum(partials[:, 8:16, :])
    s_t = jnp.sum(partials[:, 16:24, :])
    s_bce = jnp.sum(partials[:, 24:32, :]) - s_pt   # reconstruct full BCE sum
    dice_loss = 1.0 - (2.0 * s_pt + 1.0) / (s_p + s_t + 1.0)
    bce_loss = s_bce / float(total)
    return alpha * bce_loss + (1.0 - alpha) * dice_loss


def _reference(pred, target, alpha=0.5):
    pred = pred.astype(jnp.float32)
    target = target.astype(jnp.float32)
    dice = 1.0 - (2.0 * jnp.sum(pred * target) + 1.0) / (
        jnp.sum(pred) + jnp.sum(target) + 1.0)
    bce_elem = (jnp.maximum(pred, 0.0) - pred * target
                + jnp.log1p(jnp.exp(-jnp.abs(pred))))
    bce = jnp.mean(bce_elem)
    return alpha * bce + (1.0 - alpha) * dice


if __name__ == "__main__":
    key = jax.random.PRNGKey(0)
    k1, k2 = jax.random.split(key)
    # Small UNET-style shapes: batch=2, channels=4, spatial=16x16 (NCHW).
    pred = jax.random.normal(k1, (2, 4, 16, 16), dtype=jnp.float32)      # logits
    target = jax.random.bernoulli(k2, 0.5, (2, 4, 16, 16)).astype(jnp.float32)

    loss = jax.block_until_ready(combined_loss(pred, target, alpha=0.5))
    ref = jax.block_until_ready(_reference(pred, target, alpha=0.5))
    assert jnp.allclose(loss, ref, rtol=1e-5, atol=1e-5), (loss, ref)

    # Extra coverage with small max_tile_rows to exercise: multi-block grid,
    # odd block count (clamped phantom block + 2-way split), row-tail masking,
    # and a total that is not a multiple of 128 (lane-tail masking path).
    for shape, mtr in [((2, 4, 16, 17), 8),      # m=17: odd nb, phantom block
                       ((2, 4, 20, 20), 8),      # m=25: 2-way split + row tail
                       ((2, 3, 15, 15), 4096)]:  # total=1350: lane-tail pad path
        kk1, kk2 = jax.random.split(jax.random.PRNGKey(1))
        p = jax.random.normal(kk1, shape, dtype=jnp.float32)
        t = jax.random.bernoulli(kk2, 0.5, shape).astype(jnp.float32)
        got = jax.block_until_ready(combined_loss(p, t, alpha=0.5,
                                                  max_tile_rows=mtr))
        want = jax.block_until_ready(_reference(p, t, alpha=0.5))
        assert jnp.allclose(got, want, rtol=1e-5, atol=1e-5), (shape, got, want)

    print("KERNEL_OK")
</pallas_src>

<mosaic_0001>
module attributes {stable_mosaic.version = 11 : i64} {
  func.func @_combined_loss_kernel(%arg0: i32, %arg1: i32, %arg2: memref<16x128xf32, #tpu.memory_space<vmem>>, %arg3: memref<16x128xf32, #tpu.memory_space<vmem>>, %arg4: memref<1x32x128xf32, #tpu.memory_space<vmem>>) attributes {dimension_semantics = [#tpu.dimension_semantics<parallel>, #tpu.dimension_semantics<arbitrary>], iteration_bounds = array<i64: 1, 1>, scalar_prefetch = 0 : i64, scratch_operands = 0 : i64, tpu.core_type = #tpu.core_type<tc>, window_params = [{transform_indices = @transform_0, window_bounds = array<i64: 16, 128>}, {transform_indices = @transform_1, window_bounds = array<i64: 16, 128>}, {transform_indices = @transform_2, window_bounds = array<i64: 1, 32, 128>}]} {
    %c1_i32 = arith.constant 1 : i32
    %0 = arith.muli %arg0, %c1_i32 : i32
    %1 = arith.addi %0, %arg1 : i32
    %c0_i32 = arith.constant 0 : i32
    %2 = arith.cmpi eq, %arg1, %c0_i32 : i32
    %3 = arith.extui %2 : i1 to i32
    %c0_i32_0 = arith.constant 0 : i32
    %4 = arith.cmpi ne, %3, %c0_i32_0 : i32
    scf.if %4 {
      %cst = arith.constant 0.000000e+00 : f32
      %15 = vector.broadcast %cst : f32 to vector<32x128xf32>
      %c0_8 = arith.constant 0 : index
      %c0_9 = arith.constant 0 : index
      %c0_10 = arith.constant 0 : index
      %16 = vector.load %arg4[%c0_8, %c0_9, %c0_10] : memref<1x32x128xf32, #tpu.memory_space<vmem>>, vector<1x32x128xf32>
      %17 = vector.shape_cast %16 : vector<1x32x128xf32> to vector<32x128xf32>
      %18 = vector.shape_cast %15 : vector<32x128xf32> to vector<1x32x128xf32>
      tpu.vector_store %arg4[%c0_8, %c0_9, %c0_10], %18 {strides = array<i32>} : memref<1x32x128xf32, #tpu.memory_space<vmem>>, vector<1x32x128xf32>,
    } else {
    }
    %c0 = arith.constant 0 : index
    %c0_1 = arith.constant 0 : index
    %5 = vector.load %arg2[%c0, %c0_1] : memref<16x128xf32, #tpu.memory_space<vmem>>, vector<16x128xf32>
    %c0_2 = arith.constant 0 : index
    %c0_3 = arith.constant 0 : index
    %6 = vector.load %arg3[%c0_2, %c0_3] : memref<16x128xf32, #tpu.memory_space<vmem>>, vector<16x128xf32>
    %c1_i32_4 = arith.constant 1 : i32
    %7 = arith.addi %1, %c1_i32_4 : i32
    %c2048_i32 = arith.constant 2048 : i32
    %8 = arith.muli %7, %c2048_i32 : i32
    %c2048_i32_5 = arith.constant 2048 : i32
    %9 = arith.cmpi sgt, %8, %c2048_i32_5 : i32
    %true = arith.constant true
    %10 = arith.xori %9, %true : i1
    %11 = arith.extui %10 : i1 to i32
    %c0_i32_6 = arith.constant 0 : i32
    %12 = arith.cmpi ne, %11, %c0_i32_6 : i32
    scf.if %12 {
      %15 = arith.mulf %5, %6 : vector<16x128xf32>
      %cst = arith.constant 0.000000e+00 : f32
      %16 = vector.broadcast %cst : f32 to vector<16x128xf32>
      %17 = arith.maximumf %5, %16 : vector<16x128xf32>
      %18 = math.absf %5 : vector<16x128xf32>
      %cst_8 = arith.constant 0.000000e+00 : f32
      %19 = vector.broadcast %cst_8 : f32 to vector<16x128xf32>
      %20 = arith.subf %19, %18 : vector<16x128xf32>
      %21 = math.exp %20 : vector<16x128xf32>
      %22 = math.log1p %21 : vector<16x128xf32>
      %23 = arith.addf %17, %22 : vector<16x128xf32>
      %c0_9 = arith.constant 0 : index
      %c0_10 = arith.constant 0 : index
      %c0_11 = arith.constant 0 : index
      %24 = vector.load %arg4[%c0_9, %c0_10, %c0_11] : memref<1x32x128xf32, #tpu.memory_space<vmem>>, vector<1x8x128xf32>
      %25 = vector.shape_cast %24 : vector<1x8x128xf32> to vector<8x128xf32>
      %26 = vector.shape_cast %15 : vector<16x128xf32> to vector<2x8x128xf32>
      %cst_12 = arith.constant dense<0.000000e+00> : vector<8x128xf32>
      %27 = vector.multi_reduction <add>, %26, %cst_12 [0] : vector<2x8x128xf32> to vector<8x128xf32>
      %28 = arith.addf %25, %27 : vector<8x128xf32>
      %c0_13 = arith.constant 0 : index
      %c0_14 = arith.constant 0 : index
      %c0_15 = arith.constant 0 : index
      %29 = vector.load %arg4[%c0_13, %c0_14, %c0_15] : memref<1x32x128xf32, #tpu.memory_space<vmem>>, vector<1x8x128xf32>
      %30 = vector.shape_cast %29 : vector<1x8x128xf32> to vector<8x128xf32>
      %31 = vector.shape_cast %28 : vector<8x128xf32> to vector<1x8x128xf32>
      tpu.vector_store %arg4[%c0_13, %c0_14, %c0_15], %31 {strides = array<i32>} : memref<1x32x128xf32, #tpu.memory_space<vmem>>, vector<1x8x128xf32>,
      %c0_16 = arith.constant 0 : index
      %c8 = arith.constant 8 : index
      %c0_17 = arith.constant 0 : index
      %32 = vector.load %arg4[%c0_16, %c8, %c0_17] : memref<1x32x128xf32, #tpu.memory_space<vmem>>, vector<1x8x128xf32>
      %33 = vector.shape_cast %32 : vector<1x8x128xf32> to vector<8x128xf32>
      %34 = vector.shape_cast %5 : vector<16x128xf32> to vector<2x8x128xf32>
      %cst_18 = arith.constant dense<0.000000e+00> : vector<8x128xf32>
      %35 = vector.multi_reduction <add>, %34, %cst_18 [0] : vector<2x8x128xf32> to vector<8x128xf32>
      %36 = arith.addf %33, %35 : vector<8x128xf32>
      %c0_19 = arith.constant 0 : index
      %c8_20 = arith.constant 8 : index
      %c0_21 = arith.constant 0 : index
      %37 = vector.load %arg4[%c0_19, %c8_20, %c0_21] : memref<1x32x128xf32, #tpu.memory_space<vmem>>, vector<1x8x128xf32>
      %38 = vector.shape_cast %37 : vector<1x8x128xf32> to vector<8x128xf32>
      %39 = vector.shape_cast %36 : vector<8x128xf32> to vector<1x8x128xf32>
      tpu.vector_store %arg4[%c0_19, %c8_20, %c0_21], %39 {strides = array<i32>} : memref<1x32x128xf32, #tpu.memory_space<vmem>>, vector<1x8x128xf32>,
      %c0_22 = arith.constant 0 : index
      %c16 = arith.constant 16 : index
      %c0_23 = arith.constant 0 : index
      %40 = vector.load %arg4[%c0_22, %c16, %c0_23] : memref<1x32x128xf32, #tpu.memory_space<vmem>>, vector<1x8x128xf32>
      %41 = vector.shape_cast %40 : vector<1x8x128xf32> to vector<8x128xf32>
      %42 = vector.shape_cast %6 : vector<16x128xf32> to vector<2x8x128xf32>
      %cst_24 = arith.constant dense<0.000000e+00> : vector<8x128xf32>
      %43 = vector.multi_reduction <add>, %42, %cst_24 [0] : vector<2x8x128xf32> to vector<8x128xf32>
      %44 = arith.addf %41, %43 : vector<8x128xf32>
      %c0_25 = arith.constant 0 : index
      %c16_26 = arith.constant 16 : index
      %c0_27 = arith.constant 0 : index
      %45 = vector.load %arg4[%c0_25, %c16_26, %c0_27] : memref<1x32x128xf32, #tpu.memory_space<vmem>>, vector<1x8x128xf32>
      %46 = vector.shape_cast %45 : vector<1x8x128xf32> to vector<8x128xf32>
      %47 = vector.shape_cast %44 : vector<8x128xf32> to vector<1x8x128xf32>
      tpu.vector_store %arg4[%c0_25, %c16_26, %c0_27], %47 {strides = array<i32>} : memref<1x32x128xf32, #tpu.memory_space<vmem>>, vector<1x8x128xf32>,
      %c0_28 = arith.constant 0 : index
      %c24 = arith.constant 24 : index
      %c0_29 = arith.constant 0 : index
      %48 = vector.load %arg4[%c0_28, %c24, %c0_29] : memref<1x32x128xf32, #tpu.memory_space<vmem>>, vector<1x8x128xf32>
      %49 = vector.shape_cast %48 : vector<1x8x128xf32> to vector<8x128xf32>
      %50 = vector.shape_cast %23 : vector<16x128xf32> to vector<2x8x128xf32>
      %cst_30 = arith.constant dense<0.000000e+00> : vector<8x128xf32>
      %51 = vector.multi_reduction <add>, %50, %cst_30 [0] : vector<2x8x128xf32> to vector<8x128xf32>
      %52 = arith.addf %49, %51 : vector<8x128xf32>
      %c0_31 = arith.constant 0 : index
      %c24_32 = arith.constant 24 : index
      %c0_33 = arith.constant 0 : index
      %53 = vector.load %arg4[%c0_31, %c24_32, %c0_33] : memref<1x32x128xf32, #tpu.memory_space<vmem>>, vector<1x8x128xf32>
      %54 = vector.shape_cast %53 : vector<1x8x128xf32> to vector<8x128xf32>
      %55 = vector.shape_cast %52 : vector<8x128xf32> to vector<1x8x128xf32>
      tpu.vector_store %arg4[%c0_31, %c24_32, %c0_33], %55 {strides = array<i32>} : memref<1x32x128xf32, #tpu.memory_space<vmem>>, vector<1x8x128xf32>,
    } else {
    }
    %13 = arith.extui %9 : i1 to i32
    %c0_i32_7 = arith.constant 0 : i32
    %14 = arith.cmpi ne, %13, %c0_i32_7 : i32
    scf.if %14 {
      %c16_i32 = arith.constant 16 : i32
      %15 = arith.muli %1, %c16_i32 : i32
      %16 = tpu.iota {dimensions = array<i32: 0>} : vector<16x128xi32>
      %17 = vector.broadcast %15 : i32 to vector<16x128xi32>
      %18 = arith.addi %17, %16 : vector<16x128xi32>
      %19 = tpu.iota {dimensions = array<i32: 1>} : vector<16x128xi32>
      %c128_i32 = arith.constant 128 : i32
      %20 = vector.broadcast %c128_i32 : i32 to vector<16x128xi32>
      %21 = arith.muli %18, %20 : vector<16x128xi32>
      %22 = arith.addi %21, %19 : vector<16x128xi32>
      %c2048_i32_8 = arith.constant 2048 : i32
      %23 = vector.broadcast %c2048_i32_8 : i32 to vector<16x128xi32>
      %24 = arith.cmpi slt, %22, %23 : vector<16x128xi32>
      %cst = arith.constant 0.000000e+00 : f32
      %25 = vector.broadcast %cst : f32 to vector<16x128xf32>
      %26 = arith.select %24, %5, %25 : vector<16x128xi1>, vector<16x128xf32>
      %cst_9 = arith.constant 0.000000e+00 : f32
      %27 = vector.broadcast %cst_9 : f32 to vector<16x128xf32>
      %28 = arith.select %24, %6, %27 : vector<16x128xi1>, vector<16x128xf32>
      %29 = arith.mulf %26, %28 : vector<16x128xf32>
      %cst_10 = arith.constant 0.000000e+00 : f32
      %30 = vector.broadcast %cst_10 : f32 to vector<16x128xf32>
      %31 = arith.maximumf %26, %30 : vector<16x128xf32>
      %32 = math.absf %26 : vector<16x128xf32>
      %cst_11 = arith.constant 0.000000e+00 : f32
      %33 = vector.broadcast %cst_11 : f32 to vector<16x128xf32>
      %34 = arith.subf %33, %32 : vector<16x128xf32>
      %35 = math.exp %34 : vector<16x128xf32>
      %36 = math.log1p %35 : vector<16x128xf32>
      %37 = arith.addf %31, %36 : vector<16x128xf32>
      %cst_12 = arith.constant 0.000000e+00 : f32
      %38 = vector.broadcast %cst_12 : f32 to vector<16x128xf32>
      %39 = arith.select %24, %37, %38 : vector<16x128xi1>, vector<16x128xf32>
      %c0_13 = arith.constant 0 : index
      %c0_14 = arith.constant 0 : index
      %c0_15 = arith.constant 0 : index
      %40 = vector.load %arg4[%c0_13, %c0_14, %c0_15] : memref<1x32x128xf32, #tpu.memory_space<vmem>>, vector<1x8x128xf32>
      %41 = vector.shape_cast %40 : vector<1x8x128xf32> to vector<8x128xf32>
      %42 = vector.shape_cast %29 : vector<16x128xf32> to vector<2x8x128xf32>
      %cst_16 = arith.constant dense<0.000000e+00> : vector<8x128xf32>
      %43 = vector.multi_reduction <add>, %42, %cst_16 [0] : vector<2x8x128xf32> to vector<8x128xf32>
      %44 = arith.addf %41, %43 : vector<8x128xf32>
      %c0_17 = arith.constant 0 : index
      %c0_18 = arith.constant 0 : index
      %c0_19 = arith.constant 0 : index
      %45 = vector.load %arg4[%c0_17, %c0_18, %c0_19] : memref<1x32x128xf32, #tpu.memory_space<vmem>>, vector<1x8x128xf32>
      %46 = vector.shape_cast %45 : vector<1x8x128xf32> to vector<8x128xf32>
      %47 = vector.shape_cast %44 : vector<8x128xf32> to vector<1x8x128xf32>
      tpu.vector_store %arg4[%c0_17, %c0_18, %c0_19], %47 {strides = array<i32>} : memref<1x32x128xf32, #tpu.memory_space<vmem>>, vector<1x8x128xf32>,
      %c0_20 = arith.constant 0 : index
      %c8 = arith.constant 8 : index
      %c0_21 = arith.constant 0 : index
      %48 = vector.load %arg4[%c0_20, %c8, %c0_21] : memref<1x32x128xf32, #tpu.memory_space<vmem>>, vector<1x8x128xf32>
      %49 = vector.shape_cast %48 : vector<1x8x128xf32> to vector<8x128xf32>
      %50 = vector.shape_cast %26 : vector<16x128xf32> to vector<2x8x128xf32>
      %cst_22 = arith.constant dense<0.000000e+00> : vector<8x128xf32>
      %51 = vector.multi_reduction <add>, %50, %cst_22 [0] : vector<2x8x128xf32> to vector<8x128xf32>
      %52 = arith.addf %49, %51 : vector<8x128xf32>
      %c0_23 = arith.constant 0 : index
      %c8_24 = arith.constant 8 : index
      %c0_25 = arith.constant 0 : index
      %53 = vector.load %arg4[%c0_23, %c8_24, %c0_25] : memref<1x32x128xf32, #tpu.memory_space<vmem>>, vector<1x8x128xf32>
      %54 = vector.shape_cast %53 : vector<1x8x128xf32> to vector<8x128xf32>
      %55 = vector.shape_cast %52 : vector<8x128xf32> to vector<1x8x128xf32>
      tpu.vector_store %arg4[%c0_23, %c8_24, %c0_25], %55 {strides = array<i32>} : memref<1x32x128xf32, #tpu.memory_space<vmem>>, vector<1x8x128xf32>,
      %c0_26 = arith.constant 0 : index
      %c16 = arith.constant 16 : index
      %c0_27 = arith.constant 0 : index
      %56 = vector.load %arg4[%c0_26, %c16, %c0_27] : memref<1x32x128xf32, #tpu.memory_space<vmem>>, vector<1x8x128xf32>
      %57 = vector.shape_cast %56 : vector<1x8x128xf32> to vector<8x128xf32>
      %58 = vector.shape_cast %28 : vector<16x128xf32> to vector<2x8x128xf32>
      %cst_28 = arith.constant dense<0.000000e+00> : vector<8x128xf32>
      %59 = vector.multi_reduction <add>, %58, %cst_28 [0] : vector<2x8x128xf32> to vector<8x128xf32>
      %60 = arith.addf %57, %59 : vector<8x128xf32>
      %c0_29 = arith.constant 0 : index
      %c16_30 = arith.constant 16 : index
      %c0_31 = arith.constant 0 : index
      %61 = vector.load %arg4[%c0_29, %c16_30, %c0_31] : memref<1x32x128xf32, #tpu.memory_space<vmem>>, vector<1x8x128xf32>
      %62 = vector.shape_cast %61 : vector<1x8x128xf32> to vector<8x128xf32>
      %63 = vector.shape_cast %60 : vector<8x128xf32> to vector<1x8x128xf32>
      tpu.vector_store %arg4[%c0_29, %c16_30, %c0_31], %63 {strides = array<i32>} : memref<1x32x128xf32, #tpu.memory_space<vmem>>, vector<1x8x128xf32>,
      %c0_32 = arith.constant 0 : index
      %c24 = arith.constant 24 : index
      %c0_33 = arith.constant 0 : index
      %64 = vector.load %arg4[%c0_32, %c24, %c0_33] : memref<1x32x128xf32, #tpu.memory_space<vmem>>, vector<1x8x128xf32>
      %65 = vector.shape_cast %64 : vector<1x8x128xf32> to vector<8x128xf32>
      %66 = vector.shape_cast %39 : vector<16x128xf32> to vector<2x8x128xf32>
      %cst_34 = arith.constant dense<0.000000e+00> : vector<8x128xf32>
      %67 = vector.multi_reduction <add>, %66, %cst_34 [0] : vector<2x8x128xf32> to vector<8x128xf32>
      %68 = arith.addf %65, %67 : vector<8x128xf32>
      %c0_35 = arith.constant 0 : index
      %c24_36 = arith.constant 24 : index
      %c0_37 = arith.constant 0 : index
      %69 = vector.load %arg4[%c0_35, %c24_36, %c0_37] : memref<1x32x128xf32, #tpu.memory_space<vmem>>, vector<1x8x128xf32>
      %70 = vector.shape_cast %69 : vector<1x8x128xf32> to vector<8x128xf32>
      %71 = vector.shape_cast %68 : vector<8x128xf32> to vector<1x8x128xf32>
      tpu.vector_store %arg4[%c0_35, %c24_36, %c0_37], %71 {strides = array<i32>} : memref<1x32x128xf32, #tpu.memory_space<vmem>>, vector<1x8x128xf32>,
    } else {
    }
    return
  }
  func.func @transform_0(%arg0: i32, %arg1: i32) -> (i32, i32) {
    %c1_i32 = arith.constant 1 : i32
    %0 = arith.muli %arg0, %c1_i32 : i32
    %1 = arith.addi %0, %arg1 : i32
    %c0_i32 = arith.constant 0 : i32
    %c0_i32_0 = arith.constant 0 : i32
    return %1, %c0_i32 : i32, i32
  }
  func.func @transform_1(%arg0: i32, %arg1: i32) -> (i32, i32) {
    %c1_i32 = arith.constant 1 : i32
    %0 = arith.muli %arg0, %c1_i32 : i32
    %1 = arith.addi %0, %arg1 : i32
    %c0_i32 = arith.constant 0 : i32
    %c0_i32_0 = arith.constant 0 : i32
    return %1, %c0_i32 : i32, i32
  }
  func.func @transform_2(%arg0: i32, %arg1: i32) -> (i32, i32, i32) {
    %c0_i32 = arith.constant 0 : i32
    %c0_i32_0 = arith.constant 0 : i32
    %c0_i32_1 = arith.constant 0 : i32
    return %arg0, %c0_i32, %c0_i32_0 : i32, i32, i32
  }
}

</mosaic_0001>

<llo_original>
// kernel: tpu_custom_call.1
$region0: #{tpu_custom_call.1}
  #allocation0 [shape = 'u32[]', space=smem, size = 0x4, offset = 0x4, fixed_abs, tag = 'smem constant byte address 0x4 - core index']
  #allocation1 [shape = 'u32[72,128]{1,0:T(1,128)}', space=vmem, size = 0x9000, scoped, tag = 'internal scratch']
  %s0 = inlined_call_operand.hbm [shape: f32[16,128], index: 0, kind: input, shape index: {}]
  %s1 = inlined_call_operand.hbm [shape: f32[16,128], index: 1, kind: input, shape index: {}]
  %s2 = inlined_call_operand.hbm [shape: f32[1,32,128], index: 2, kind: output, shape index: {}]
  %s3 = sld [smem:[#allocation0]]
  $region38: #{tpu_custom_call.1} parent=0
    _
  %s5 = ssub.s32 1, %s3
  %s6 = scalar_select 0, %s5, %s3
  $region1: #{tpu_custom_call.1} parent=0
    #allocation2 [shape = 'u8[8192]{0}', space=vmem, size = 0x2000, scoped, tag = 'input window, operand 0, single buffered']
    #allocation3 [shape = 's32[1]{0}', space=sflag, size = 0x4, scoped, tag = 'scoped memory for tpu_custom_call.1']
    #allocation4 [shape = 's32[1]{0}', space=sflag, size = 0x4, scoped, tag = 'scoped memory for tpu_custom_call.1']
    #allocation5 [shape = 'u8[8192]{0}', space=vmem, size = 0x2000, scoped, tag = 'input window, operand 1, single buffered']
    #allocation6 [shape = 's32[1]{0}', space=sflag, size = 0x4, scoped, tag = 'scoped memory for tpu_custom_call.1']
    #allocation7 [shape = 'u8[16384]{0}', space=vmem, size = 0x4000, scoped, tag = 'output window, operand 0, single buffered']
    %7 = vsyncpa [#allocation3], 0
    %8 = vsyncpa [#allocation6], 0
    %9 = vsyncpa [#allocation4], 0
    // Predicated region
    $region2: #{tpu_custom_call.1} parent=1 // pred_check
      _
    $region3: #{tpu_custom_call.1} parent=1 // pred_check_branch
      %11 = sbr.rel (0) target = $region5
    $region4: #{tpu_custom_call.1} parent=1 // pred_region
      %s12 = sadd.s32 0, 0
      %s13 = smul.u32 2, %s12
      %15 = vsyncadd [#allocation3], 0
      %s16 = smul.addr %s13, 8
      %s17 = scalar_lea.hbm %s0, %s16
      %s18 = sshll.u32 %s17, 4
      %s19 = int_to_ptr.hbm [resolvable:$true] %s18
      %s20 = sshll.u32 [#allocation2], 4
      %s21 = int_to_ptr.vmem [resolvable:$true] %s20
      %26 = dma.hbm_to_vmem [thread:$0]  %s19, 256, %s21, [#allocation3], 128, 128, 8
    $region5: #{tpu_custom_call.1} parent=1 // pred_fallthru
      _
    // Predicated region
    $region6: #{tpu_custom_call.1} parent=1 // pred_check
      _
    $region7: #{tpu_custom_call.1} parent=1 // pred_check_branch
      %28 = sbr.rel (0) target = $region9
    $region8: #{tpu_custom_call.1} parent=1 // pred_region
      %s29 = sadd.s32 0, 0
      %s30 = smul.u32 2, %s29
      %32 = vsyncadd [#allocation6], 0
      %s33 = smul.addr %s30, 8
      %s34 = scalar_lea.hbm %s1, %s33
      %s35 = sshll.u32 %s34, 4
      %s36 = int_to_ptr.hbm [resolvable:$true] %s35
      %s37 = sshll.u32 [#allocation5], 4
      %s38 = int_to_ptr.vmem [resolvable:$true] %s37
      %43 = dma.hbm_to_vmem [thread:$0]  %s36, 256, %s38, [#allocation6], 128, 128, 8
    $region9: #{tpu_custom_call.1} parent=1 // pred_fallthru
      _
    // Predicated region
    $region10: #{tpu_custom_call.1} parent=1 // pred_check
      _
    $region11: #{tpu_custom_call.1} parent=1 // pred_check_branch
      %45 = sbr.rel (0) target = $region13
    $region12: #{tpu_custom_call.1} parent=1 // pred_region
      %47 = dma.done [#allocation3], 256
    $region13: #{tpu_custom_call.1} parent=1 // pred_fallthru
      _
    // Predicated region
    $region14: #{tpu_custom_call.1} parent=1 // pred_check
      _
    $region15: #{tpu_custom_call.1} parent=1 // pred_check_branch
      %49 = sbr.rel (0) target = $region17
    $region16: #{tpu_custom_call.1} parent=1 // pred_region
      %51 = dma.done [#allocation6], 256
    $region17: #{tpu_custom_call.1} parent=1 // pred_fallthru
      _
    %s52 = sadd.s32 0, 0
    %s53 = smul.u32 2, %s52
    %s54 = sadd.s32 0, 0
    %s55 = smul.u32 2, %s54
    %s56 = sadd.s32 0, 0
    %p57 = scmp.eq.s32.totalorder 0, 0
    // Predicated region
    $region18: #{tpu_custom_call.1} parent=1 // pred_check
      %p58 = pneg %p57
    $region19: #{tpu_custom_call.1} parent=1 // pred_check_branch
      %60 = sbr.rel (%p58) target = $region21
    $region20: #{tpu_custom_call.1} parent=1 // pred_region
      %61 = vst [vmem:[#allocation7] sm:$0xff] 0.0
      %62 = vst [vmem:[#allocation7 + $0x8] sm:$0xff] 0.0
      %63 = vst [vmem:[#allocation7 + $0x10] sm:$0xff] 0.0
      %64 = vst [vmem:[#allocation7 + $0x18] sm:$0xff] 0.0
    $region21: #{tpu_custom_call.1} parent=1 // pred_fallthru
      _
    %v65 = vld [vmem:[#allocation2] sm:$0xff]
    %v66 = vld [vmem:[#allocation2 + $0x8] sm:$0xff]
    %v67 = vld [vmem:[#allocation5] sm:$0xff]
    %v68 = vld [vmem:[#allocation5 + $0x8] sm:$0xff]
    %s69 = sadd.s32 %s56, 1
    %s70 = smul.u32 %s69, 2048
    %p71 = scmp.gt.s32.totalorder %s70, 2048
    %p72 = scmp.le.s32.totalorder %s70, 2048
    // Predicated region
    $region22: #{tpu_custom_call.1} parent=1 // pred_check
      %p73 = pneg %p72
    $region23: #{tpu_custom_call.1} parent=1 // pred_check_branch
      %75 = sbr.rel (%p73) target = $region25
    $region24: #{tpu_custom_call.1} parent=1 // pred_region
      %v76 = vmul.f32 %v65, %v67
      %v77 = vmul.f32 %v66, %v68
      %v78 = vmax.f32 %v65, 0.0
      %v79 = vmax.f32 %v66, 0.0
      %v80 = vand.u32 2147483647, %v65
      %v81 = vand.u32 2147483647, %v66
      %v82 = vsub.f32 0.0, %v80
      %v83 = vsub.f32 0.0, %v81
      %v84 = vmul.f32 %v82, 1.442695
      %v85 = vpow.pop %v84
      %v86 = vmul.f32 %v83, 1.442695
      %v87 = vpow.pop %v86
      %v88 = vadd.f32 %v85, 1.0
      %v89 = vlog2.pop %v88
      %v90 = vmul.f32 %v89, 0.6931472
      %v91 = vmul.f32 -0.5, %v85
      %v92 = vadd.f32 %v91, 1.0
      %v93 = vmul.f32 %v92, %v85
      %v94 = vand.u32 2147483647, %v85
      %vm95 = vcmp.lt.f32.partialorder %v94, 0.0004427343
      %v96 = vsel %vm95, %v93, %v90
      %v97 = vadd.f32 %v87, 1.0
      %v98 = vlog2.pop %v97
      %v99 = vmul.f32 %v98, 0.6931472
      %v100 = vmul.f32 -0.5, %v87
      %v101 = vadd.f32 %v100, 1.0
      %v102 = vmul.f32 %v101, %v87
      %v103 = vand.u32 2147483647, %v87
      %vm104 = vcmp.lt.f32.partialorder %v103, 0.0004427343
      %v105 = vsel %vm104, %v102, %v99
      %v106 = vadd.f32 %v78, %v96
      %v107 = vadd.f32 %v79, %v105
      %v108 = vld [vmem:[#allocation7] sm:$0xff]
      %v109 = vadd.f32 %v76, %v77
      %v110 = vadd.f32 %v108, %v109
      %111 = vst [vmem:[#allocation7] sm:$0xff] %v110
      %v112 = vld [vmem:[#allocation7 + $0x8] sm:$0xff]
      %v113 = vadd.f32 %v65, %v66
      %v114 = vadd.f32 %v112, %v113
      %115 = vst [vmem:[#allocation7 + $0x8] sm:$0xff] %v114
      %v116 = vld [vmem:[#allocation7 + $0x10] sm:$0xff]
      %v117 = vadd.f32 %v67, %v68
      %v118 = vadd.f32 %v116, %v117
      %119 = vst [vmem:[#allocation7 + $0x10] sm:$0xff] %v118
      %v120 = vld [vmem:[#allocation7 + $0x18] sm:$0xff]
      %v121 = vadd.f32 %v106, %v107
      %v122 = vadd.f32 %v120, %v121
      %123 = vst [vmem:[#allocation7 + $0x18] sm:$0xff] %v122
    $region25: #{tpu_custom_call.1} parent=1 // pred_fallthru
      _
    // Predicated region
    $region26: #{tpu_custom_call.1} parent=1 // pred_check
      %p124 = pneg %p71
    $region27: #{tpu_custom_call.1} parent=1 // pred_check_branch
      %126 = sbr.rel (%p124) target = $region29
    $region28: #{tpu_custom_call.1} parent=1 // pred_region
      %s127 = smul.u32 %s56, 16
      %v128 = vlaneseq
      %v129 = vshrl.u32 %v128, 7
      %v130 = vadd.s32 %v129, 8
      %v131 = vstv %s127
      %v132 = vadd.s32 %v131, %v129
      %v133 = vadd.s32 %v131, %v130
      %v134 = vlaneseq
      %v135 = vand.u32 %v134, 127
      %v136 = vmul.u32 %v132, 128
      %v137 = vmul.u32 %v133, 128
      %v138 = vadd.s32 %v136, %v135
      %v139 = vadd.s32 %v137, %v135
      %vm140 = vcmp.lt.s32.totalorder %v138, 2048
      %vm141 = vcmp.lt.s32.totalorder %v139, 2048
      %v142 = vsel %vm140, %v65, 0.0
      %v143 = vsel %vm141, %v66, 0.0
      %v144 = vsel %vm140, %v67, 0.0
      %v145 = vsel %vm141, %v68, 0.0
      %v146 = vmul.f32 %v142, %v144
      %v147 = vmul.f32 %v143, %v145
      %v148 = vmax.f32 %v142, 0.0
      %v149 = vmax.f32 %v143, 0.0
      %v150 = vand.u32 2147483647, %v142
      %v151 = vand.u32 2147483647, %v143
      %v152 = vsub.f32 0.0, %v150
      %v153 = vsub.f32 0.0, %v151
      %v154 = vmul.f32 %v152, 1.442695
      %v155 = vpow.pop %v154
      %v156 = vmul.f32 %v153, 1.442695
      %v157 = vpow.pop %v156
      %v158 = vadd.f32 %v155, 1.0
      %v159 = vlog2.pop %v158
      %v160 = vmul.f32 %v159, 0.6931472
      %v161 = vmul.f32 -0.5, %v155
      %v162 = vadd.f32 %v161, 1.0
      %v163 = vmul.f32 %v162, %v155
      %v164 = vand.u32 2147483647, %v155
      %vm165 = vcmp.lt.f32.partialorder %v164, 0.0004427343
      %v166 = vsel %vm165, %v163, %v160
      %v167 = vadd.f32 %v157, 1.0
      %v168 = vlog2.pop %v167
      %v169 = vmul.f32 %v168, 0.6931472
      %v170 = vmul.f32 -0.5, %v157
      %v171 = vadd.f32 %v170, 1.0
      %v172 = vmul.f32 %v171, %v157
      %v173 = vand.u32 2147483647, %v157
      %vm174 = vcmp.lt.f32.partialorder %v173, 0.0004427343
      %v175 = vsel %vm174, %v172, %v169
      %v176 = vadd.f32 %v148, %v166
      %v177 = vadd.f32 %v149, %v175
      %v178 = vsel %vm140, %v176, 0.0
      %v179 = vsel %vm141, %v177, 0.0
      %v180 = vld [vmem:[#allocation7] sm:$0xff]
      %v181 = vadd.f32 %v146, %v147
      %v182 = vadd.f32 %v180, %v181
      %183 = vst [vmem:[#allocation7] sm:$0xff] %v182
      %v184 = vld [vmem:[#allocation7 + $0x8] sm:$0xff]
      %v185 = vadd.f32 %v142, %v143
      %v186 = vadd.f32 %v184, %v185
      %187 = vst [vmem:[#allocation7 + $0x8] sm:$0xff] %v186
      %v188 = vld [vmem:[#allocation7 + $0x10] sm:$0xff]
      %v189 = vadd.f32 %v144, %v145
      %v190 = vadd.f32 %v188, %v189
      %191 = vst [vmem:[#allocation7 + $0x10] sm:$0xff] %v190
      %v192 = vld [vmem:[#allocation7 + $0x18] sm:$0xff]
      %v193 = vadd.f32 %v178, %v179
      %v194 = vadd.f32 %v192, %v193
      %195 = vst [vmem:[#allocation7 + $0x18] sm:$0xff] %v194
    $region29: #{tpu_custom_call.1} parent=1 // pred_fallthru
      _
    // Predicated region
    $region30: #{tpu_custom_call.1} parent=1 // pred_check
      _
    $region31: #{tpu_custom_call.1} parent=1 // pred_check_branch
      %197 = sbr.rel (0) target = $region33
    $region32: #{tpu_custom_call.1} parent=1 // pred_region
      %199 = vsyncadd [#allocation4], 0
      %s200 = sshll.u32 [#allocation7], 4
      %s201 = int_to_ptr.vmem [resolvable:$true] %s200
      %s202 = sshll.u32 %s2, 4
      %s203 = int_to_ptr.hbm [resolvable:$true] %s202
      %208 = dma.vmem_to_hbm [thread:$0]  %s201, 512, %s203, [#allocation4], 128, 128, 8
    $region33: #{tpu_custom_call.1} parent=1 // pred_fallthru
      _
    // Predicated region
    $region34: #{tpu_custom_call.1} parent=1 // pred_check
      _
    $region35: #{tpu_custom_call.1} parent=1 // pred_check_branch
      %210 = sbr.rel (0) target = $region37
    $region36: #{tpu_custom_call.1} parent=1 // pred_region
      %212 = dma.done [#allocation4], 512
    $region37: #{tpu_custom_call.1} parent=1 // pred_fallthru
      _
    %213 = vsyncpa [#allocation3], 1
    %214 = vsyncpa [#allocation6], 1
    %215 = vsyncpa [#allocation4], 1

</llo_original>
